<compile_context>
chip_gen: v5e
topology: v5e:2x2
jax: 0.10.0
libtpu: 0.0.40
codegen_flags: <defaults>
</compile_context>

<pallas_src>
import functools

import jax
import jax.numpy as jnp
from jax.experimental import pallas as pl
from jax.experimental.pallas import tpu as pltpu


def _patch_conv_kernel(x_ref, w_ref, b_ref, o_ref):
    # x_ref: (K, tm) compute-dtype   w_ref: (C_out, K) compute-dtype
    # b_ref: (C_out, 1) f32          o_ref: (C_out, tm) out-dtype
    # Single MXU matmul; output block is already in NCDHW (channel, spatial)
    # order so no post-kernel transpose / slice is needed.
    y = jnp.dot(w_ref[...], x_ref[...], preferred_element_type=jnp.float32)
    o_ref[...] = (y + b_ref[...]).astype(o_ref.dtype)


def _vmem_limit_bytes():
    """Scoped VMEM limit derived from the actual chip (v7x has 64 MiB/TC)."""
    try:
        cap = int(pltpu.get_tpu_info().vmem_capacity_bytes)
    except Exception:  # pragma: no cover - older jax / no device info
        cap = 64 * 1024 * 1024          # conservative (v7x per-TC VMEM)
    return (cap * 3) // 4               # headroom for Mosaic internal scratch


def _pick_tile(Sp, K, C_out, in_bytes, out_bytes, vmem_limit, tm_max):
    """Spatial-tile size per batch item.

    Budget counts the double-buffered input/output streams *and* the resident
    weight + bias (the previous version ignored them, which is unsafe for
    large-K downsample configs on v7x's 64 MiB VMEM).
    Returns (tm, Sp_pad): tm == Sp (full extent, no padding) whenever it fits,
    otherwise a multiple of 128 so tiled loads/stores stay lane-dense.
    """
    resident = 2 * (K * C_out * in_bytes) + 2 * (C_out * 128 * 4)   # weight + bias
    per_col = 2 * (K * in_bytes) + 2 * (C_out * out_bytes)          # 2x-buffered
    budget = max(0, vmem_limit - resident - (2 << 20))
    cap = budget // per_col
    if Sp <= min(cap, tm_max):
        return Sp, Sp                                   # one tile per batch item
    tm = max(128, (min(cap, tm_max) // 128) * 128)      # lane-dense tile
    Sp_pad = ((Sp + tm - 1) // tm) * tm
    return tm, Sp_pad


def _patch_conv(patches, w_flat, bias, *, out_dtype, tm_max):
    """patches: (N, K, Sp), w_flat: (C_out, K), bias: (C_out,) -> (N, C_out, Sp)."""
    N, K, Sp = patches.shape
    C_out = w_flat.shape[0]
    in_bytes = patches.dtype.itemsize
    out_bytes = jnp.dtype(out_dtype).itemsize

    vmem_limit = _vmem_limit_bytes()
    tm, Sp_pad = _pick_tile(Sp, K, C_out, in_bytes, out_bytes, vmem_limit, tm_max)
    if Sp_pad != Sp:
        patches = jnp.pad(patches, ((0, 0), (0, 0), (0, Sp_pad - Sp)))
    n_tiles = Sp_pad // tm

    bias2 = bias.reshape(C_out, 1).astype(jnp.float32)

    out = pl.pallas_call(
        _patch_conv_kernel,
        out_shape=jax.ShapeDtypeStruct((N, C_out, Sp_pad), out_dtype),
        grid_spec=pltpu.PrefetchScalarGridSpec(
            num_scalar_prefetch=0,
            grid=(N, n_tiles),
            in_specs=[
                pl.BlockSpec((None, K, tm), lambda n, i: (n, 0, i)),   # patches
                pl.BlockSpec((C_out, K), lambda n, i: (0, 0)),         # weight (resident)
                pl.BlockSpec((C_out, 1), lambda n, i: (0, 0)),         # bias  (resident)
            ],
            out_specs=pl.BlockSpec((None, C_out, tm), lambda n, i: (n, 0, i)),
        ),
        compiler_params=pltpu.CompilerParams(
            dimension_semantics=("parallel", "parallel"),   # batch x spatial tiles
            vmem_limit_bytes=vmem_limit,
            allow_input_fusion=[True, True, True],          # fuse patch transpose into DMA
        ),
    )(patches, w_flat, bias2)

    if Sp_pad != Sp:
        out = out[:, :, :Sp]
    return out


def conv3d_wrapper_forward(x, params, *, kernel_size, stride, padding=0,
                           groups=1, factor=False,
                           out_dtype=jnp.float32, compute_dtype=jnp.bfloat16,
                           tm_max=2048):
    """Conv3dWrapper.forward: x (N,C,T,H,W) -> (N, C_out, T', H', W')."""
    kt, kh, kw = kernel_size
    assert tuple(stride) == tuple(kernel_size), "Pallas path assumes kernel==stride"
    assert padding == 0 and groups == 1, "Pallas path assumes padding=0, groups=1"
    # TODO(synk): general overlapping / padded / grouped Conv3d is not ported here.

    if factor:
        # time-factorized weight: (C_out,C_in,kh,kw) x (kt,) -> (C_out,C_in,kt,kh,kw)
        w5 = params["weight"][:, :, None, :, :] * params["time_weight"][:, None, None]
    else:
        w5 = params["weight"]                               # (C_out, C_in, kt, kh, kw)
    bias = params["bias"]

    N, C, T, H, W = x.shape
    Tp, Hp, Wp = T // kt, H // kh, W // kw
    C_out = w5.shape[0]
    K = C * kt * kh * kw
    Sp = Tp * Hp * Wp

    # K-major patch layout (N, K, Sp): the kernel's (C_out, tm) output blocks are
    # then exactly flattened NCDHW -> no post-kernel transpose/pad/slice.
    # Cast BEFORE the transpose to halve that HBM round trip if it materializes.
    xb = x.astype(compute_dtype)
    xr = xb.reshape(N, C, Tp, kt, Hp, kh, Wp, kw)
    xr = jnp.transpose(xr, (0, 1, 3, 5, 7, 2, 4, 6))        # (N, C, kt, kh, kw, Tp, Hp, Wp)
    patches = xr.reshape(N, K, Sp)

    w_flat = w5.reshape(C_out, K).astype(compute_dtype)     # (C_out, K): matches patch K order

    out = _patch_conv(patches, w_flat, bias, out_dtype=out_dtype, tm_max=tm_max)
    return out.reshape(N, C_out, Tp, Hp, Wp)                # NCDHW, PyTorch parity


def init_params(key, in_ch, out_ch, kt, kh, kw, factor=False):
    k1, k2 = jax.random.split(key)
    fan_in = in_ch * kt * kh * kw
    bound = 1.0 / jnp.sqrt(fan_in)
    bias = jax.random.uniform(k2, (out_ch,), jnp.float32, -bound, bound)
    if factor:
        weight = jax.random.uniform(k1, (out_ch, in_ch, kh, kw),
                                    jnp.float32, -bound, bound)
        time_weight = jnp.ones((kt,), jnp.float32) / kt
        return {"weight": weight, "time_weight": time_weight, "bias": bias}
    weight = jax.random.uniform(k1, (out_ch, in_ch, kt, kh, kw),
                                jnp.float32, -bound, bound)
    return {"weight": weight, "bias": bias}


def reference_forward(x, params, *, kernel_size, stride, padding=0, factor=False):
    """Pure-JAX reference for Conv3dWrapper.forward."""
    if factor:
        w5 = params["weight"][:, :, None, :, :] * params["time_weight"][:, None, None]
    else:
        w5 = params["weight"]
    pad = [(padding, padding)] * 3 if isinstance(padding, int) else padding
    y = jax.lax.conv_general_dilated(
        x, w5, window_strides=tuple(stride), padding=pad,
        dimension_numbers=("NCDHW", "OIDHW", "NCDHW"))
    return y + params["bias"][None, :, None, None, None]


if __name__ == "__main__":
    # Conv3dWrapper config as used for the ConvNeXt-3D stem: dim_in=3,
    # dim_out=96, kernel_size = stride = [4,4,4], padding=0, factor=False.
    N, C_in, T, H, W = 2, 3, 8, 16, 16
    ksz = (4, 4, 4)
    C_out = 96

    key = jax.random.PRNGKey(0)
    kx, kp = jax.random.split(key)
    x = jax.random.normal(kx, (N, C_in, T, H, W), jnp.float32)

    # factor=False (default) path, f32 output (PyTorch parity check)
    params = init_params(kp, C_in, C_out, *ksz, factor=False)
    fwd = jax.jit(functools.partial(conv3d_wrapper_forward,
                                    kernel_size=ksz, stride=ksz))
    out = fwd(x, params)
    jax.block_until_ready(out)
    ref = reference_forward(x, params, kernel_size=ksz, stride=ksz)
    assert out.shape == (N, C_out, T // 4, H // 4, W // 4), out.shape
    err = float(jnp.max(jnp.abs(out - ref)))
    assert err < 2e-2, err          # bf16 operands, f32 accumulation

    # factor=True path (time-factorized weight)
    params_f = init_params(jax.random.PRNGKey(1), C_in, C_out, *ksz, factor=True)
    fwd_f = jax.jit(functools.partial(conv3d_wrapper_forward,
                                      kernel_size=ksz, stride=ksz, factor=True))
    out_f = fwd_f(x, params_f)
    jax.block_until_ready(out_f)
    ref_f = reference_forward(x, params_f, kernel_size=ksz, stride=ksz, factor=True)
    err_f = float(jnp.max(jnp.abs(out_f - ref_f)))
    assert err_f < 2e-2, err_f

    # bf16-output path (halves output HBM bytes when the consumer accepts bf16)
    fwd_bf = jax.jit(functools.partial(conv3d_wrapper_forward, kernel_size=ksz,
                                       stride=ksz, out_dtype=jnp.bfloat16))
    out_bf = fwd_bf(x, params)
    jax.block_until_ready(out_bf)
    assert out_bf.dtype == jnp.bfloat16 and out_bf.shape == out.shape
    err_bf = float(jnp.max(jnp.abs(out_bf.astype(jnp.float32) - ref)))
    assert err_bf < 5e-2, err_bf

    print("KERNEL_OK")
</pallas_src>

<mosaic_0001>
module attributes {stable_mosaic.version = 11 : i64} {
  func.func @_patch_conv_kernel(%arg0: i32, %arg1: i32, %arg2: memref<1x192x32xbf16, #tpu.memory_space<vmem>>, %arg3: memref<96x192xbf16, #tpu.memory_space<vmem>>, %arg4: memref<96x1xf32, #tpu.memory_space<vmem>>, %arg5: memref<1x96x32xf32, #tpu.memory_space<vmem>>) attributes {dimension_semantics = [#tpu.dimension_semantics<parallel>, #tpu.dimension_semantics<parallel>], iteration_bounds = array<i64: 2, 1>, scalar_prefetch = 0 : i64, scratch_operands = 0 : i64, tpu.core_type = #tpu.core_type<tc>, window_params = [{transform_indices = @transform_0, window_bounds = array<i64: 1, 192, 32>}, {pipeline_mode = #tpu.pipeline_mode<synchronous>, transform_indices = @transform_1, window_bounds = array<i64: 96, 192>}, {pipeline_mode = #tpu.pipeline_mode<synchronous>, transform_indices = @transform_2, window_bounds = array<i64: 96, 1>}, {transform_indices = @transform_3, window_bounds = array<i64: 1, 96, 32>}]} {
    %c0 = arith.constant 0 : index
    %c0_0 = arith.constant 0 : index
    %0 = vector.load %arg3[%c0, %c0_0] : memref<96x192xbf16, #tpu.memory_space<vmem>>, vector<96x192xbf16>
    %c0_1 = arith.constant 0 : index
    %c0_2 = arith.constant 0 : index
    %c0_3 = arith.constant 0 : index
    %1 = vector.load %arg2[%c0_1, %c0_2, %c0_3] : memref<1x192x32xbf16, #tpu.memory_space<vmem>>, vector<1x192x32xbf16>
    %2 = vector.shape_cast %1 : vector<1x192x32xbf16> to vector<192x32xbf16>
    %cst = arith.constant dense<0.000000e+00> : vector<96x32xf32>
    %3 = tpu.matmul %0, %2, %cst {dimension_numbers = #tpu.dot_dimension_numbers<[1], [0], [0], [1], [0, 0, 1, 1], [], []>} : vector<96x192xbf16>, vector<192x32xbf16>, vector<96x32xf32> -> vector<96x32xf32>
    %c0_4 = arith.constant 0 : index
    %c0_5 = arith.constant 0 : index
    %4 = vector.load %arg4[%c0_4, %c0_5] : memref<96x1xf32, #tpu.memory_space<vmem>>, vector<96x1xf32>
    %5 = vector.broadcast %4 : vector<96x1xf32> to vector<96x32xf32>
    %6 = arith.addf %3, %5 : vector<96x32xf32>
    %c0_6 = arith.constant 0 : index
    %c0_7 = arith.constant 0 : index
    %c0_8 = arith.constant 0 : index
    %7 = vector.load %arg5[%c0_6, %c0_7, %c0_8] : memref<1x96x32xf32, #tpu.memory_space<vmem>>, vector<1x96x32xf32>
    %8 = vector.shape_cast %7 : vector<1x96x32xf32> to vector<96x32xf32>
    %9 = vector.shape_cast %6 : vector<96x32xf32> to vector<1x96x32xf32>
    tpu.vector_store %arg5[%c0_6, %c0_7, %c0_8], %9 {strides = array<i32>} : memref<1x96x32xf32, #tpu.memory_space<vmem>>, vector<1x96x32xf32>,
    return
  }
  func.func @transform_0(%arg0: i32, %arg1: i32) -> (i32, i32, i32) {
    %c0_i32 = arith.constant 0 : i32
    %c0_i32_0 = arith.constant 0 : i32
    return %arg0, %c0_i32, %arg1 : i32, i32, i32
  }
  func.func @transform_1(%arg0: i32, %arg1: i32) -> (i32, i32) {
    %c0_i32 = arith.constant 0 : i32
    %c0_i32_0 = arith.constant 0 : i32
    %c0_i32_1 = arith.constant 0 : i32
    return %c0_i32, %c0_i32_0 : i32, i32
  }
  func.func @transform_2(%arg0: i32, %arg1: i32) -> (i32, i32) {
    %c0_i32 = arith.constant 0 : i32
    %c0_i32_0 = arith.constant 0 : i32
    %c0_i32_1 = arith.constant 0 : i32
    return %c0_i32, %c0_i32_0 : i32, i32
  }
  func.func @transform_3(%arg0: i32, %arg1: i32) -> (i32, i32, i32) {
    %c0_i32 = arith.constant 0 : i32
    %c0_i32_0 = arith.constant 0 : i32
    return %arg0, %c0_i32, %arg1 : i32, i32, i32
  }
}

</mosaic_0001>

<llo_original>
// kernel: conv3d_wrapper_forward.1
$region0: #{conv3d_wrapper_forward.1}
  #allocation0 [shape = 'u32[]', space=smem, size = 0x4, offset = 0x4, fixed_abs, tag = 'smem constant byte address 0x4 - core index']
  #allocation1 [shape = 'u32[72,128]{1,0:T(1,128)}', space=vmem, size = 0x9000, scoped, tag = 'internal scratch']
  %s0 = inlined_call_operand.vmem [shape: bf16[2,192,32], index: 0, kind: input, shape index: {}]
  %s1 = inlined_call_operand.vmem [shape: bf16[96,192], index: 1, kind: input, shape index: {}]
  %s2 = inlined_call_operand.vmem [shape: f32[96,1], index: 2, kind: input, shape index: {}]
  %s3 = inlined_call_operand.vmem [shape: f32[2,96,32], index: 3, kind: output, shape index: {}]
  %s4 = sld [smem:[#allocation0]]
  $region45: #{conv3d_wrapper_forward.1} parent=0
    _
  %s6 = ssub.s32 1, %s4
  %s7 = scalar_select 0, %s6, %s4
  loop: start=0, step=1, limit=4
  $region2: #{conv3d_wrapper_forward.1} parent=0 // loop_pre_header
    _
  $region3: #{conv3d_wrapper_forward.1} parent=0 // loop_header
    %s9 = sphi 0, %s13
    %p10 = scmp.ge.s32.totalorder %s9, 4
    %s16 = sphi 0, %s28
    %s17 = sphi 0, %s24
    %s18 = sphi 0, %s16
    %s19 = sphi 0, %s17
    %s20 = sphi 0, %s18
    %s21 = sphi 0, %s19
    %s33 = sphi 0, %s35
    %s36 = sphi 0, %s33
    %s37 = sphi 0, %s36
    %s53 = sphi 0, %s37
    %s57 = sphi 0, %s57
    %s59 = sphi 0, %s57
    %s60 = sphi 0, %s59
    %s74 = sphi 0, %s60
    %s78 = sphi 0, %s78
    %s80 = sphi 0, %s78
    %s81 = sphi 0, %s80
    %s95 = sphi 0, %s81
    %s103 = sphi 0, %s105
    %s106 = sphi 0, %s103
    %s107 = sphi 0, %s106
    %s123 = sphi 0, %s107
  $region4: #{conv3d_wrapper_forward.1} parent=0 // loop_header_branch
    %12 = sbr.rel (%p10) target = $region8
  $region5: #{conv3d_wrapper_forward.1} parent=0 // loop_body
    %s14 = ssub.s32 %s9, 1
    %s15 = ssub.s32 %s9, 2
    %s22 = sadd.s32 1, %s17
    %p23 = scmp.ge.s32.totalorder %s22, 1
    %s24 = scalar_select %p23, 0, %s22
    %s25 = sadd.s32 1, %s16
    %s26 = scalar_select %p23, %s25, %s16
    %p27 = scmp.ge.s32.totalorder %s26, 2
    %s28 = scalar_select %p27, 0, %s26
    %s29 = ssub.s32 %s16, %s28
    %s30 = ssub.s32 %s17, %s24
    %s31 = sor.u32 %s29, %s30
    %p32 = scmp.eq.s32.totalorder %s31, 0
    %s34 = sadd.s32 %s33, 1
    %s35 = scalar_select %p32, %s33, %s34
    %p38 = pneg %p32
    %p39 = scmp.eq.s32.totalorder %s9, 1
    %p40 = por %p38, %p39
    %p41 = scmp.ne.s32.totalorder %s33, %s36
    %p42 = scmp.eq.s32.totalorder %s9, 0
    %p43 = por %p41, %p42
    %p44 = scmp.ne.s32.totalorder %s33, %s36
    %p45 = scmp.eq.s32.totalorder %s14, 1
    %p46 = por %p44, %p45
    %p47 = scmp.ne.s32.totalorder %s36, %s37
    %p48 = scmp.eq.s32.totalorder %s14, 0
    %p49 = por %p47, %p48
    %p50 = scmp.ne.s32.totalorder %s36, %s37
    %p51 = scmp.eq.s32.totalorder %s15, 1
    %p52 = por %p50, %p51
    %p54 = scmp.ne.s32.totalorder %s37, %s53
    %p55 = scmp.eq.s32.totalorder %s15, 0
    %p56 = por %p54, %p55
    %s58 = sadd.s32 %s57, 1
    %p61 = scmp.eq.s32.totalorder %s9, 1
    %p62 = scmp.ne.s32.totalorder %s57, %s59
    %p63 = scmp.eq.s32.totalorder %s9, 0
    %p64 = por %p62, %p63
    %p65 = scmp.ne.s32.totalorder %s57, %s59
    %p66 = scmp.eq.s32.totalorder %s14, 1
    %p67 = por %p65, %p66
    %p68 = scmp.ne.s32.totalorder %s59, %s60
    %p69 = scmp.eq.s32.totalorder %s14, 0
    %p70 = por %p68, %p69
    %p71 = scmp.ne.s32.totalorder %s59, %s60
    %p72 = scmp.eq.s32.totalorder %s15, 1
    %p73 = por %p71, %p72
    %p75 = scmp.ne.s32.totalorder %s60, %s74
    %p76 = scmp.eq.s32.totalorder %s15, 0
    %p77 = por %p75, %p76
    %s79 = sadd.s32 %s78, 1
    %p82 = scmp.eq.s32.totalorder %s9, 1
    %p83 = scmp.ne.s32.totalorder %s78, %s80
    %p84 = scmp.eq.s32.totalorder %s9, 0
    %p85 = por %p83, %p84
    %p86 = scmp.ne.s32.totalorder %s78, %s80
    %p87 = scmp.eq.s32.totalorder %s14, 1
    %p88 = por %p86, %p87
    %p89 = scmp.ne.s32.totalorder %s80, %s81
    %p90 = scmp.eq.s32.totalorder %s14, 0
    %p91 = por %p89, %p90
    %p92 = scmp.ne.s32.totalorder %s80, %s81
    %p93 = scmp.eq.s32.totalorder %s15, 1
    %p94 = por %p92, %p93
    %p96 = scmp.ne.s32.totalorder %s81, %s95
    %p97 = scmp.eq.s32.totalorder %s15, 0
    %p98 = por %p96, %p97
    %s99 = ssub.s32 %s16, %s28
    %s100 = ssub.s32 %s17, %s24
    %s101 = sor.u32 %s99, %s100
    %p102 = scmp.eq.s32.totalorder %s101, 0
    %s104 = sadd.s32 %s103, 1
    %s105 = scalar_select %p102, %s103, %s104
    %p108 = pneg %p102
    %p109 = scmp.eq.s32.totalorder %s9, 1
    %p110 = por %p108, %p109
    %p111 = scmp.ne.s32.totalorder %s103, %s106
    %p112 = scmp.eq.s32.totalorder %s9, 0
    %p113 = por %p111, %p112
    %p114 = scmp.ne.s32.totalorder %s103, %s106
    %p115 = scmp.eq.s32.totalorder %s14, 1
    %p116 = por %p114, %p115
    %p117 = scmp.ne.s32.totalorder %s106, %s107
    %p118 = scmp.eq.s32.totalorder %s14, 0
    %p119 = por %p117, %p118
    %p120 = scmp.ne.s32.totalorder %s106, %s107
    %p121 = scmp.eq.s32.totalorder %s15, 1
    %p122 = por %p120, %p121
    %p124 = scmp.ne.s32.totalorder %s107, %s123
    %p125 = scmp.eq.s32.totalorder %s15, 0
    %p126 = por %p124, %p125
    %p127 = scmp.le.s32.totalorder 1, %s9
    %p128 = scmp.lt.s32.totalorder %s9, 3
    %p129 = pnand %p127, %p128
    %p130 = pneg %p129
    // Predicated region
    $region9: #{conv3d_wrapper_forward.1} parent=5 // pred_check
      _
    $region10: #{conv3d_wrapper_forward.1} parent=5 // pred_check_branch
      %132 = sbr.rel (%p129) target = $region12
    $region11: #{conv3d_wrapper_forward.1} parent=5 // pred_region
      %s133 = ssub.s32 %s9, 1
      // Predicated region
      $region13: #{conv3d_wrapper_forward.1} parent=11 // pred_check
        %p134 = pneg %p70
      $region14: #{conv3d_wrapper_forward.1} parent=11 // pred_check_branch
        %136 = sbr.rel (%p134) target = $region16
      $region15: #{conv3d_wrapper_forward.1} parent=11 // pred_region
        _
      $region16: #{conv3d_wrapper_forward.1} parent=11 // pred_fallthru
        _
      // Predicated region
      $region17: #{conv3d_wrapper_forward.1} parent=11 // pred_check
        %p137 = pneg %p91
      $region18: #{conv3d_wrapper_forward.1} parent=11 // pred_check_branch
        %139 = sbr.rel (%p137) target = $region20
      $region19: #{conv3d_wrapper_forward.1} parent=11 // pred_region
        _
      $region20: #{conv3d_wrapper_forward.1} parent=11 // pred_fallthru
        _
    $region12: #{conv3d_wrapper_forward.1} parent=5 // pred_fallthru
      _
    %p140 = scmp.lt.s32.totalorder %s9, 2
    // Predicated region
    $region21: #{conv3d_wrapper_forward.1} parent=5 // pred_check
      %p141 = pneg %p140
    $region22: #{conv3d_wrapper_forward.1} parent=5 // pred_check_branch
      %143 = sbr.rel (%p141) target = $region24
    $region23: #{conv3d_wrapper_forward.1} parent=5 // pred_region
      // Predicated region
      $region25: #{conv3d_wrapper_forward.1} parent=23 // pred_check
        %p144 = pneg %p43
      $region26: #{conv3d_wrapper_forward.1} parent=23 // pred_check_branch
        %146 = sbr.rel (%p144) target = $region28
      $region27: #{conv3d_wrapper_forward.1} parent=23 // pred_region
        %p147 = scmp.lt.s32.totalorder %s16, 1
        %s148 = scalar_select %p147, %s16, 1
        %p149 = scmp.lt.s32.totalorder %s17, 0
        %s150 = scalar_select %p149, %s17, 0
        %s151 = smul.addr %s148, 24
        %s152 = sadd.s32 %s150, %s151
        %s153 = smul.addr %s152, 4
        %s154 = scalar_lea.vmem %s0, %s153
      $region28: #{conv3d_wrapper_forward.1} parent=23 // pred_fallthru
        _
    $region24: #{conv3d_wrapper_forward.1} parent=5 // pred_fallthru
      _
    %p155 = scmp.le.s32.totalorder 1, %s9
    %p156 = scmp.lt.s32.totalorder %s9, 3
    %p157 = pnand %p155, %p156
    %p158 = pneg %p157
    // Predicated region
    $region29: #{conv3d_wrapper_forward.1} parent=5 // pred_check
      _
    $region30: #{conv3d_wrapper_forward.1} parent=5 // pred_check_branch
      %160 = sbr.rel (%p157) target = $region32
    $region31: #{conv3d_wrapper_forward.1} parent=5 // pred_region
      %s161 = ssub.s32 %s9, 1
      %p162 = scmp.lt.s32.totalorder %s18, 1
      %s163 = scalar_select %p162, %s18, 1
      %p164 = scmp.lt.s32.totalorder %s19, 0
      %s165 = scalar_select %p164, %s19, 0
      %s166 = smul.addr %s163, 24
      %s167 = sadd.s32 %s165, %s166
      %s168 = smul.addr %s167, 4
      %s169 = scalar_lea.vmem %s0, %s168
      %p170 = pneg %p49
      %p171 = pneg %p46
      %p172 = pneg %p70
      %p173 = pneg %p67
      %p174 = pneg %p91
      %p175 = pneg %p88
      %p176 = pneg %p119
      %p177 = pneg %p116
      %p178 = scmp.lt.s32.totalorder %s18, 1
      %s179 = scalar_select %p178, %s18, 1
      %p180 = scmp.lt.s32.totalorder %s19, 0
      %s181 = scalar_select %p180, %s19, 0
      %s182 = smul.addr %s179, 12
      %s183 = sadd.s32 %s181, %s182
      %s184 = smul.addr %s183, 8
      %s185 = scalar_lea.vmem %s3, %s184
      %p186 = scmp.lt.s32.totalorder %s18, 1
      %s187 = scalar_select %p186, %s18, 1
      %p188 = scmp.lt.s32.totalorder %s19, 0
      %s189 = scalar_select %p188, %s19, 0
      %s190 = smul.addr %s187, 24
      %s191 = sadd.s32 %s189, %s190
      %s192 = smul.addr %s191, 4
      %s193 = scalar_lea.vmem %s0, %s192
      %p194 = scmp.lt.s32.totalorder %s18, 1
      %s195 = scalar_select %p194, %s18, 1
      %p196 = scmp.lt.s32.totalorder %s19, 0
      %s197 = scalar_select %p196, %s19, 0
      %s198 = smul.addr %s195, 12
      %s199 = sadd.s32 %s197, %s198
      %s200 = smul.addr %s199, 8
      %s201 = scalar_lea.vmem %s3, %s200
      %v203 = vld [vmem:[%s1] sm:$0xff]
      %v204 = vld [vmem:[%s1 + $0x8] sm:$0xff]
      %v205 = vld [vmem:[%s1 + $0x10] sm:$0xff]
      %v206 = vld [vmem:[%s1 + $0x18] sm:$0xff]
      %v207 = vld [vmem:[%s1 + $0x20] sm:$0xff]
      %v208 = vld [vmem:[%s1 + $0x28] sm:$0xff]
      %v209 = vld [vmem:[%s1 + $0x30] sm:$0xff]
      %v210 = vld [vmem:[%s1 + $0x38] sm:$0xff]
      %v211 = vld [vmem:[%s1 + $0x40] sm:$0xff]
      %v212 = vld [vmem:[%s1 + $0x48] sm:$0xff]
      %v213 = vld [vmem:[%s1 + $0x50] sm:$0xff]
      %v214 = vld [vmem:[%s1 + $0x58] sm:$0xff]
      %v215 = vld [vmem:[%s193] sm:$0xf]
      %v216 = vld [vmem:[%s193 + $0x4] sm:$0xf]
      %v217 = vld [vmem:[%s193 + $0x8] sm:$0xf]
      %v218 = vld [vmem:[%s193 + $0xc] sm:$0xf]
      %v219 = vld [vmem:[%s193 + $0x10] sm:$0xf]
      %v220 = vld [vmem:[%s193 + $0x14] sm:$0xf]
      %v221 = vld [vmem:[%s193 + $0x18] sm:$0xf]
      %v222 = vld [vmem:[%s193 + $0x1c] sm:$0xf]
      %v223 = vld [vmem:[%s193 + $0x20] sm:$0xf]
      %v224 = vld [vmem:[%s193 + $0x24] sm:$0xf]
      %v225 = vld [vmem:[%s193 + $0x28] sm:$0xf]
      %v226 = vld [vmem:[%s193 + $0x2c] sm:$0xf]
      %v227 = vld [vmem:[%s193 + $0x30] sm:$0xf]
      %v228 = vld [vmem:[%s193 + $0x34] sm:$0xf]
      %v229 = vld [vmem:[%s193 + $0x38] sm:$0xf]
      %v230 = vld [vmem:[%s193 + $0x3c] sm:$0xf]
      %v231 = vld [vmem:[%s193 + $0x40] sm:$0xf]
      %v232 = vld [vmem:[%s193 + $0x44] sm:$0xf]
      %v233 = vld [vmem:[%s193 + $0x48] sm:$0xf]
      %v234 = vld [vmem:[%s193 + $0x4c] sm:$0xf]
      %v235 = vld [vmem:[%s193 + $0x50] sm:$0xf]
      %v236 = vld [vmem:[%s193 + $0x54] sm:$0xf]
      %v237 = vld [vmem:[%s193 + $0x58] sm:$0xf]
      %v238 = vld [vmem:[%s193 + $0x5c] sm:$0xf]
      %v239 = vld [vmem:[%s2] sm:$0xff]
      %v240 = vld [vmem:[%s2 + $0x8] sm:$0xff]
      %v241 = vld [vmem:[%s2 + $0x10] sm:$0xff]
      %v242 = vld [vmem:[%s2 + $0x18] sm:$0xff]
      %v243 = vld [vmem:[%s2 + $0x20] sm:$0xff]
      %v244 = vld [vmem:[%s2 + $0x28] sm:$0xff]
      %v245 = vld [vmem:[%s2 + $0x30] sm:$0xff]
      %v246 = vld [vmem:[%s2 + $0x38] sm:$0xff]
      %v247 = vld [vmem:[%s2 + $0x40] sm:$0xff]
      %v248 = vld [vmem:[%s2 + $0x48] sm:$0xff]
      %v249 = vld [vmem:[%s2 + $0x50] sm:$0xff]
      %v250 = vld [vmem:[%s2 + $0x58] sm:$0xff]
      %252 = vset.pattern.permute.xlu0 0
      %253 = vperm.xlu0 %252, %v239
      %v254 = vpop.permute.xlu0 %253
      %257 = vset.pattern.permute.xlu0 0
      %258 = vperm.xlu0 %257, %v240
      %v259 = vpop.permute.xlu0 %258
      %262 = vset.pattern.permute.xlu0 0
      %263 = vperm.xlu0 %262, %v241
      %v264 = vpop.permute.xlu0 %263
      %267 = vset.pattern.permute.xlu0 0
      %268 = vperm.xlu0 %267, %v242
      %v269 = vpop.permute.xlu0 %268
      %272 = vset.pattern.permute.xlu0 0
      %273 = vperm.xlu0 %272, %v243
      %v274 = vpop.permute.xlu0 %273
      %277 = vset.pattern.permute.xlu0 0
      %278 = vperm.xlu0 %277, %v244
      %v279 = vpop.permute.xlu0 %278
      %282 = vset.pattern.permute.xlu0 0
      %283 = vperm.xlu0 %282, %v245
      %v284 = vpop.permute.xlu0 %283
      %287 = vset.pattern.permute.xlu0 0
      %288 = vperm.xlu0 %287, %v246
      %v289 = vpop.permute.xlu0 %288
      %292 = vset.pattern.permute.xlu0 0
      %293 = vperm.xlu0 %292, %v247
      %v294 = vpop.permute.xlu0 %293
      %297 = vset.pattern.permute.xlu0 0
      %298 = vperm.xlu0 %297, %v248
      %v299 = vpop.permute.xlu0 %298
      %302 = vset.pattern.permute.xlu0 0
      %303 = vperm.xlu0 %302, %v249
      %v304 = vpop.permute.xlu0 %303
      %307 = vset.pattern.permute.xlu0 0
      %308 = vperm.xlu0 %307, %v250
      %v309 = vpop.permute.xlu0 %308
      %v323 = vunpack.c.l.b16 %v203
      %v324 = vunpack.c.h.b16 %v203
      %v325 = vunpack.c.l.b16 %v204
      %v326 = vunpack.c.h.b16 %v204
      %v327 = vunpack.c.l.b16 %v205
      %v328 = vunpack.c.h.b16 %v205
      %v329 = vunpack.c.l.b16 %v206
      %v330 = vunpack.c.h.b16 %v206
      %v331 = vunpack.c.l.b16 %v207
      %v332 = vunpack.c.h.b16 %v207
      %v333 = vunpack.c.l.b16 %v208
      %v334 = vunpack.c.h.b16 %v208
      %v335 = vunpack.c.l.b16 %v209
      %v336 = vunpack.c.h.b16 %v209
      %v337 = vunpack.c.l.b16 %v210
      %v338 = vunpack.c.h.b16 %v210
      %v339 = vunpack.c.l.b16 %v211
      %v340 = vunpack.c.h.b16 %v211
      %v341 = vunpack.c.l.b16 %v212
      %v342 = vunpack.c.h.b16 %v212
      %v343 = vunpack.c.l.b16 %v213
      %v344 = vunpack.c.h.b16 %v213
      %v345 = vunpack.c.l.b16 %v214
      %v346 = vunpack.c.h.b16 %v214
      %v347 = vpack.c.b16 %v325, %v323
      %v348 = vpack.c.b16 %v326, %v324
      %v349 = vpack.c.b16 %v329, %v327
      %v350 = vpack.c.b16 %v330, %v328
      %v351 = vpack.c.b16 %v333, %v331
      %v352 = vpack.c.b16 %v334, %v332
      %v353 = vpack.c.b16 %v337, %v335
      %v354 = vpack.c.b16 %v338, %v336
      %v355 = vpack.c.b16 %v341, %v339
      %v356 = vpack.c.b16 %v342, %v340
      %v357 = vpack.c.b16 %v345, %v343
      %v358 = vpack.c.b16 %v346, %v344
      %v389 = vunpack.c.l.b16 %v215
      %v390 = vunpack.c.l.b16 %v216
      %v391 = vunpack.c.l.b16 %v217
      %v392 = vunpack.c.l.b16 %v218
      %v393 = vunpack.c.l.b16 %v219
      %v394 = vunpack.c.l.b16 %v220
      %v395 = vunpack.c.l.b16 %v221
      %v396 = vunpack.c.l.b16 %v222
      %v397 = vunpack.c.l.b16 %v223
      %v398 = vunpack.c.l.b16 %v224
      %v399 = vunpack.c.l.b16 %v225
      %v400 = vunpack.c.l.b16 %v226
      %v401 = vunpack.c.l.b16 %v227
      %v402 = vunpack.c.l.b16 %v228
      %v403 = vunpack.c.l.b16 %v229
      %v404 = vunpack.c.l.b16 %v230
      %v405 = vunpack.c.l.b16 %v231
      %v406 = vunpack.c.l.b16 %v232
      %v407 = vunpack.c.l.b16 %v233
      %v408 = vunpack.c.l.b16 %v234
      %v409 = vunpack.c.l.b16 %v235
      %v410 = vunpack.c.l.b16 %v236
      %v411 = vunpack.c.l.b16 %v237
      %v412 = vunpack.c.l.b16 %v238
      %v413 = vpack.c.b16 %v390, %v389
      %v414 = vpack.c.b16 %v392, %v391
      %v415 = vpack.c.b16 %v394, %v393
      %v416 = vpack.c.b16 %v396, %v395
      %v417 = vpack.c.b16 %v398, %v397
      %v418 = vpack.c.b16 %v400, %v399
      %v419 = vpack.c.b16 %v402, %v401
      %v420 = vpack.c.b16 %v404, %v403
      %v421 = vpack.c.b16 %v406, %v405
      %v422 = vpack.c.b16 %v408, %v407
      %v423 = vpack.c.b16 %v410, %v409
      %v424 = vpack.c.b16 %v412, %v411
      %vm437 = vcmask 523264
      %v439 = vsel %vm437, %v348, 0
      %v442 = vsel %vm437, %v350, 0
      %v445 = vsel %vm437, %v352, 0
      %v448 = vsel %vm437, %v354, 0
      %v451 = vsel %vm437, %v356, 0
      %v454 = vsel %vm437, %v358, 0
      %456 = vmatpush.bf16.msra.mxu0 %v420
      %457 = vmatpush.bf16.msra.mxu0 %v419
      %458 = vmatpush.bf16.msra.mxu0 %v418
      %459 = vmatpush.bf16.msra.mxu0 %v417
      %460 = vmatpush.bf16.msra.mxu0 %v416
      %461 = vmatpush.bf16.msra.mxu0 %v415
      %462 = vmatpush.bf16.msra.mxu0 %v414
      %463 = vmatpush.bf16.msra.mxu0 %v413
      %464 = vmatmul.bf16.gmra.mxu0 %v347
      %v465 = vpop.f32.mrf.mxu0
      %v466 = vadd.f32 %v254, %v465
      %v467 = vpop.f32.mrf.mxu0
      %v468 = vadd.f32 %v259, %v467
      %469 = vmatmul.bf16.gmra.mxu0 %v349
      %v470 = vpop.f32.mrf.mxu0
      %v471 = vadd.f32 %v264, %v470
      %v472 = vpop.f32.mrf.mxu0
      %v473 = vadd.f32 %v269, %v472
      %474 = vmatmul.bf16.gmra.mxu0 %v351
      %v475 = vpop.f32.mrf.mxu0
      %v476 = vadd.f32 %v274, %v475
      %v477 = vpop.f32.mrf.mxu0
      %v478 = vadd.f32 %v279, %v477
      %479 = vmatmul.bf16.gmra.mxu0 %v353
      %v480 = vpop.f32.mrf.mxu0
      %v481 = vadd.f32 %v284, %v480
      %v482 = vpop.f32.mrf.mxu0
      %v483 = vadd.f32 %v289, %v482
      %484 = vmatmul.bf16.gmra.mxu0 %v355
      %v485 = vpop.f32.mrf.mxu0
      %v486 = vadd.f32 %v294, %v485
      %v487 = vpop.f32.mrf.mxu0
      %v488 = vadd.f32 %v299, %v487
      %489 = vmatmul.bf16.gmra.mxu0 %v357
      %v490 = vpop.f32.mrf.mxu0
      %v491 = vadd.f32 %v304, %v490
      %v492 = vpop.f32.mrf.mxu0
      %v493 = vadd.f32 %v309, %v492
      %494 = vdwg.mxu0
      %495 = vmatpush.bf16.msra.mxu0 0
      %496 = vmatpush.bf16.msra.mxu0 0
      %497 = vmatpush.bf16.msra.mxu0 0
      %498 = vmatpush.bf16.msra.mxu0 0
      %499 = vmatpush.bf16.msra.mxu0 %v424
      %500 = vmatpush.bf16.msra.mxu0 %v423
      %501 = vmatpush.bf16.msra.mxu0 %v422
      %502 = vmatpush.bf16.msra.mxu0 %v421
      %503 = vmatmul.bf16.gmra.mxu0 %v439
      %v504 = vpop.f32.mrf.mxu0
      %v505 = vadd.f32 %v466, %v504
      %v506 = vpop.f32.mrf.mxu0
      %v507 = vadd.f32 %v468, %v506
      %508 = vmatmul.bf16.gmra.mxu0 %v442
      %v509 = vpop.f32.mrf.mxu0
      %v510 = vadd.f32 %v471, %v509
      %v511 = vpop.f32.mrf.mxu0
      %v512 = vadd.f32 %v473, %v511
      %513 = vmatmul.bf16.gmra.mxu0 %v445
      %v514 = vpop.f32.mrf.mxu0
      %v515 = vadd.f32 %v476, %v514
      %v516 = vpop.f32.mrf.mxu0
      %v517 = vadd.f32 %v478, %v516
      %518 = vmatmul.bf16.gmra.mxu0 %v448
      %v519 = vpop.f32.mrf.mxu0
      %v520 = vadd.f32 %v481, %v519
      %v521 = vpop.f32.mrf.mxu0
      %v522 = vadd.f32 %v483, %v521
      %523 = vmatmul.bf16.gmra.mxu0 %v451
      %v524 = vpop.f32.mrf.mxu0
      %v525 = vadd.f32 %v486, %v524
      %v526 = vpop.f32.mrf.mxu0
      %v527 = vadd.f32 %v488, %v526
      %528 = vmatmul.bf16.gmra.mxu0 %v454
      %v529 = vpop.f32.mrf.mxu0
      %v530 = vadd.f32 %v491, %v529
      %v531 = vpop.f32.mrf.mxu0
      %v532 = vadd.f32 %v493, %v531
      %533 = vdwg.mxu0
      %vm534 = vcmask 261120
      %535 = vst.msk [vmem:[%s201] sm:$0xff] %vm534, %v505
      %536 = vst.msk [vmem:[%s201 + $0x8] sm:$0xff] %vm534, %v507
      %537 = vst.msk [vmem:[%s201 + $0x10] sm:$0xff] %vm534, %v510
      %538 = vst.msk [vmem:[%s201 + $0x18] sm:$0xff] %vm534, %v512
      %539 = vst.msk [vmem:[%s201 + $0x20] sm:$0xff] %vm534, %v515
      %540 = vst.msk [vmem:[%s201 + $0x28] sm:$0xff] %vm534, %v517
      %541 = vst.msk [vmem:[%s201 + $0x30] sm:$0xff] %vm534, %v520
      %542 = vst.msk [vmem:[%s201 + $0x38] sm:$0xff] %vm534, %v522
      %543 = vst.msk [vmem:[%s201 + $0x40] sm:$0xff] %vm534, %v525
      %544 = vst.msk [vmem:[%s201 + $0x48] sm:$0xff] %vm534, %v527
      %545 = vst.msk [vmem:[%s201 + $0x50] sm:$0xff] %vm534, %v530
      %546 = vst.msk [vmem:[%s201 + $0x58] sm:$0xff] %vm534, %v532
      %p547 = scmp.lt.s32.totalorder %s18, 1
      %s548 = scalar_select %p547, %s18, 1
      %p549 = scmp.lt.s32.totalorder %s19, 0
      %s550 = scalar_select %p549, %s19, 0
      %s551 = smul.addr %s548, 12
      %s552 = sadd.s32 %s550, %s551
      %s553 = smul.addr %s552, 8
      %s554 = scalar_lea.vmem %s3, %s553
      // Predicated region
      $region33: #{conv3d_wrapper_forward.1} parent=31 // pred_check
        %p555 = pneg %p116
      $region34: #{conv3d_wrapper_forward.1} parent=31 // pred_check_branch
        %557 = sbr.rel (%p555) target = $region36
      $region35: #{conv3d_wrapper_forward.1} parent=31 // pred_region
        _
      $region36: #{conv3d_wrapper_forward.1} parent=31 // pred_fallthru
        _
    $region32: #{conv3d_wrapper_forward.1} parent=5 // pred_fallthru
      _
    %p558 = scmp.le.s32.totalorder 2, %s9
    // Predicated region
    $region37: #{conv3d_wrapper_forward.1} parent=5 // pred_check
      %p559 = pneg %p558
    $region38: #{conv3d_wrapper_forward.1} parent=5 // pred_check_branch
      %561 = sbr.rel (%p559) target = $region40
    $region39: #{conv3d_wrapper_forward.1} parent=5 // pred_region
      %s562 = ssub.s32 %s9, 2
      // Predicated region
      $region41: #{conv3d_wrapper_forward.1} parent=39 // pred_check
        %p563 = pneg %p122
      $region42: #{conv3d_wrapper_forward.1} parent=39 // pred_check_branch
        %565 = sbr.rel (%p563) target = $region44
      $region43: #{conv3d_wrapper_forward.1} parent=39 // pred_region
        %p566 = scmp.lt.s32.totalorder %s20, 1
        %s567 = scalar_select %p566, %s20, 1
        %p568 = scmp.lt.s32.totalorder %s21, 0
        %s569 = scalar_select %p568, %s21, 0
        %s570 = smul.addr %s567, 12
        %s571 = sadd.s32 %s569, %s570
        %s572 = smul.addr %s571, 8
        %s573 = scalar_lea.vmem %s3, %s572
      $region44: #{conv3d_wrapper_forward.1} parent=39 // pred_fallthru
        _
    $region40: #{conv3d_wrapper_forward.1} parent=5 // pred_fallthru
      _
  $region6: #{conv3d_wrapper_forward.1} parent=0 // loop_footer
    %s13 = sadd.s32 1, %s9
  $region7: #{conv3d_wrapper_forward.1} parent=0 // loop_footer_branch
    %8 = sbr.rel target = $region3
  $region8: #{conv3d_wrapper_forward.1} parent=0 // loop_exit
    _

</llo_original>
